<compile_context>
chip_gen: v6e
topology: v6e:2x2x1
jax: 0.10.0
libtpu: 0.0.40
codegen_flags: <defaults>
</compile_context>

<pallas_src>
import jax
import jax.numpy as jnp
from jax import lax
from jax.experimental import pallas as pl
from jax.experimental.pallas import tpu as pltpu


def _round_up(n, m):
    return ((n + m - 1) // m) * m


def _make_mlp_kernel(layer_dims, row_offsets, max_in):
    """layer_dims: ((in_f, out_f), ...) per layer (static Python ints).
    row_offsets: 8-aligned row start of each layer inside the packed slab.
    max_in: column width of the weight part of the slab (bias sits in col max_in)."""
    acts = ("sigmoid", "sigmoid", "relu", None)   # linear1, linear2, linear3, output

    def kernel(x_ref, wb_ref, o_ref):
        x = x_ref[...]            # (tile, num_inputs): natural layout, batch on sublanes
        wb = wb_ref[...]          # (padded_rows, max_in + 1): resident weight/bias slab

        h = None
        for li, ((in_f, out_f), act) in enumerate(zip(layer_dims, acts)):
            r0 = row_offsets[li]
            w = wb[r0:r0 + out_f, 0:in_f]               # (out_f, in_f)
            b = wb[r0:r0 + out_f, max_in:max_in + 1]    # (out_f, 1) -> lane broadcast
            if li == 0:
                # Contract the in-dim of BOTH operands: (out_f, in) x (tile, in)
                # -> (out_f, tile).  Batch moves onto the lane axis with no
                # wrapper-side HBM transpose of x.
                h = lax.dot_general(w, x, (((1,), (1,)), ((), ())),
                                    preferred_element_type=jnp.float32) + b
            else:
                # h is already (features, tile): batch stays on lanes.
                h = jnp.dot(w, h, preferred_element_type=jnp.float32) + b
            if act == "sigmoid":
                h = jax.nn.sigmoid(h)
            elif act == "relu":
                h = jnp.maximum(h, 0.0)

        # Lane-dense store: last dim = batch tile (multiple of 128).
        o_ref[...] = h.astype(o_ref.dtype)

    return kernel


def _pack_params(params, max_in):
    """Pack all (W, b) into one f32 slab.  Each layer gets an 8-aligned row band
    of shape (round_up(out_f, 8), max_in + 1): weights zero-padded along the
    in-dim in columns [0, max_in), bias in column max_in."""
    bands = []
    offsets = []
    r = 0
    for w, b in params:
        out_f, in_f = w.shape
        band_rows = _round_up(out_f, 8)
        band = jnp.zeros((band_rows, max_in + 1), jnp.float32)
        band = band.at[:out_f, :in_f].set(w.astype(jnp.float32))
        band = band.at[:out_f, max_in].set(b.astype(jnp.float32))
        bands.append(band)
        offsets.append(r)
        r += band_rows
    return jnp.concatenate(bands, axis=0), tuple(offsets)


def mlp_forward(x, params, *, batch_tile=16384):
    """x: (B, num_inputs) f32 (PyTorch layout).
    params: [(W, b)] with W of shape (out, in) and b of shape (out,)
    (PyTorch nn.Linear native layout)."""
    B, num_inputs = x.shape
    layer_dims = tuple((w.shape[1], w.shape[0]) for w, _ in params)
    num_outputs = layer_dims[-1][1]
    max_in = max(in_f for in_f, _ in layer_dims)
    assert layer_dims[0][0] == num_inputs

    wb, row_offsets = _pack_params(params, max_in)

    # One grid step unless the batch exceeds batch_tile lanes.  No forced >=2-step
    # split: it only helps (on 2-TC v7x) once per-step work exceeds the ~0.35us
    # per-step pipeline overhead, which requires much larger tiles than these.
    tile = max(128, min(_round_up(B, 128), (batch_tile // 128) * 128))
    grid_steps = pl.cdiv(B, tile)
    b_pad = grid_steps * tile
    if b_pad != B:
        # Zero-pad the ragged tail in the natural (B, num_inputs) layout; the
        # corresponding garbage output columns are sliced off below.
        x = jnp.pad(x, ((0, b_pad - B), (0, 0)))

    kernel = _make_mlp_kernel(layer_dims, row_offsets, max_in)

    out_t = pl.pallas_call(
        kernel,
        out_shape=jax.ShapeDtypeStruct((num_outputs, b_pad), x.dtype),
        grid_spec=pltpu.PrefetchScalarGridSpec(
            num_scalar_prefetch=0,
            grid=(grid_steps,),
            in_specs=[
                # x tile in its natural layout (no wrapper transpose).
                pl.BlockSpec((tile, num_inputs), lambda i: (i, 0)),
                # Packed weight/bias slab: constant index -> VMEM-resident.
                pl.BlockSpec(wb.shape, lambda i: (0, 0)),
            ],
            # Lane-dense output: (num_outputs, tile), tile is a multiple of 128.
            out_specs=pl.BlockSpec((num_outputs, tile), lambda i: (0, i)),
        ),
        compiler_params=pltpu.CompilerParams(
            dimension_semantics=("parallel",)),
    )(x, wb)

    # Only the tiny (num_outputs, B) result is transposed back to PyTorch layout.
    return jnp.transpose(out_t[:, :B])


def init_params(key, num_inputs, num_outputs):
    """Deterministic synthetic init (PyTorch nn.Linear-style uniform bounds).
    Weights stored as (out, in), biases as (out,) -- PyTorch native."""
    dims = [(num_inputs, 10), (10, 15), (15, 5), (5, num_outputs)]
    params = []
    for fan_in, fan_out in dims:
        key, kw, kb = jax.random.split(key, 3)
        bound = 1.0 / jnp.sqrt(fan_in)
        w = jax.random.uniform(kw, (fan_out, fan_in), jnp.float32, -bound, bound)
        b = jax.random.uniform(kb, (fan_out,), jnp.float32, -bound, bound)
        params.append((w, b))
    return params


def mlp_reference(x, params):
    (w1, b1), (w2, b2), (w3, b3), (w4, b4) = params
    h = jax.nn.sigmoid(x @ w1.T + b1)
    h = jax.nn.sigmoid(h @ w2.T + b2)
    h = jnp.maximum(h @ w3.T + b3, 0.0)
    return h @ w4.T + b4


if __name__ == "__main__":
    key = jax.random.PRNGKey(0)
    num_inputs, num_outputs = 16, 3

    kx, kp, kx2 = jax.random.split(key, 3)
    params = init_params(kp, num_inputs, num_outputs)

    # Case 1: single-grid-step path (tile = padded batch), the preferred layout.
    batch = 512
    x = jax.random.normal(kx, (batch, num_inputs), jnp.float32)
    out = jax.block_until_ready(mlp_forward(x, params))
    ref = mlp_reference(x, params)
    assert out.shape == (batch, num_outputs)
    assert jnp.allclose(out, ref, atol=1e-5, rtol=1e-5), "mismatch (single step)"

    # Case 2: multi-step pipelined path (batch_tile forces 2 grid steps).
    out_ms = jax.block_until_ready(mlp_forward(x, params, batch_tile=256))
    assert jnp.allclose(out_ms, ref, atol=1e-5, rtol=1e-5), "mismatch (multi step)"

    # Case 3: ragged small batch (zero-pad to 128 lanes + slice back).
    x2 = jax.random.normal(kx2, (100, num_inputs), jnp.float32)
    out2 = jax.block_until_ready(mlp_forward(x2, params))
    ref2 = mlp_reference(x2, params)
    assert out2.shape == (100, num_outputs)
    assert jnp.allclose(out2, ref2, atol=1e-5, rtol=1e-5), "mismatch (ragged batch)"

    print("KERNEL_OK")
</pallas_src>

<mosaic_0001>
module attributes {stable_mosaic.version = 11 : i64} {
  func.func @kernel(%arg0: i32, %arg1: memref<512x16xf32, #tpu.memory_space<vmem>>, %arg2: memref<48x17xf32, #tpu.memory_space<vmem>>, %arg3: memref<3x512xf32, #tpu.memory_space<vmem>>) attributes {dimension_semantics = [#tpu.dimension_semantics<parallel>], iteration_bounds = array<i64: 1>, scalar_prefetch = 0 : i64, scratch_operands = 0 : i64, tpu.core_type = #tpu.core_type<tc>, window_params = [{transform_indices = @transform_0, window_bounds = array<i64: 512, 16>}, {pipeline_mode = #tpu.pipeline_mode<synchronous>, transform_indices = @transform_1, window_bounds = array<i64: 48, 17>}, {transform_indices = @transform_2, window_bounds = array<i64: 3, 512>}]} {
    %c0 = arith.constant 0 : index
    %c0_0 = arith.constant 0 : index
    %0 = vector.load %arg1[%c0, %c0_0] : memref<512x16xf32, #tpu.memory_space<vmem>>, vector<512x16xf32>
    %c0_1 = arith.constant 0 : index
    %c0_2 = arith.constant 0 : index
    %1 = vector.load %arg2[%c0_1, %c0_2] : memref<48x17xf32, #tpu.memory_space<vmem>>, vector<48x17xf32>
    %2 = vector.extract_strided_slice %1 {offsets = [0, 0], sizes = [10, 16], strides = [1, 1]} : vector<48x17xf32> to vector<10x16xf32>
    %3 = vector.extract_strided_slice %1 {offsets = [0, 16], sizes = [10, 1], strides = [1, 1]} : vector<48x17xf32> to vector<10x1xf32>
    %cst = arith.constant dense<0.000000e+00> : vector<10x512xf32>
    %4 = tpu.matmul %2, %0, %cst {dimension_numbers = #tpu.dot_dimension_numbers<[1], [1], [0], [0], [0, 0, 1, 0], [], []>} : vector<10x16xf32>, vector<512x16xf32>, vector<10x512xf32> -> vector<10x512xf32>
    %5 = vector.broadcast %3 : vector<10x1xf32> to vector<10x512xf32>
    %6 = arith.addf %4, %5 : vector<10x512xf32>
    %7 = arith.negf %6 : vector<10x512xf32>
    %8 = math.exp %7 : vector<10x512xf32>
    %cst_3 = arith.constant 1.000000e+00 : f32
    %9 = vector.broadcast %cst_3 : f32 to vector<10x512xf32>
    %10 = arith.addf %9, %8 : vector<10x512xf32>
    %11 = arith.divf %9, %10 : vector<10x512xf32>
    %12 = vector.extract_strided_slice %1 {offsets = [16, 0], sizes = [15, 10], strides = [1, 1]} : vector<48x17xf32> to vector<15x10xf32>
    %13 = vector.extract_strided_slice %1 {offsets = [16, 16], sizes = [15, 1], strides = [1, 1]} : vector<48x17xf32> to vector<15x1xf32>
    %cst_4 = arith.constant dense<0.000000e+00> : vector<15x512xf32>
    %14 = tpu.matmul %12, %11, %cst_4 {dimension_numbers = #tpu.dot_dimension_numbers<[1], [0], [0], [1], [0, 0, 1, 1], [], []>} : vector<15x10xf32>, vector<10x512xf32>, vector<15x512xf32> -> vector<15x512xf32>
    %15 = vector.broadcast %13 : vector<15x1xf32> to vector<15x512xf32>
    %16 = arith.addf %14, %15 : vector<15x512xf32>
    %17 = arith.negf %16 : vector<15x512xf32>
    %18 = math.exp %17 : vector<15x512xf32>
    %cst_5 = arith.constant 1.000000e+00 : f32
    %19 = vector.broadcast %cst_5 : f32 to vector<15x512xf32>
    %20 = arith.addf %19, %18 : vector<15x512xf32>
    %21 = arith.divf %19, %20 : vector<15x512xf32>
    %22 = vector.extract_strided_slice %1 {offsets = [32, 0], sizes = [5, 15], strides = [1, 1]} : vector<48x17xf32> to vector<5x15xf32>
    %23 = vector.extract_strided_slice %1 {offsets = [32, 16], sizes = [5, 1], strides = [1, 1]} : vector<48x17xf32> to vector<5x1xf32>
    %cst_6 = arith.constant dense<0.000000e+00> : vector<5x512xf32>
    %24 = tpu.matmul %22, %21, %cst_6 {dimension_numbers = #tpu.dot_dimension_numbers<[1], [0], [0], [1], [0, 0, 1, 1], [], []>} : vector<5x15xf32>, vector<15x512xf32>, vector<5x512xf32> -> vector<5x512xf32>
    %25 = vector.broadcast %23 : vector<5x1xf32> to vector<5x512xf32>
    %26 = arith.addf %24, %25 : vector<5x512xf32>
    %cst_7 = arith.constant 0.000000e+00 : f32
    %27 = vector.broadcast %cst_7 : f32 to vector<5x512xf32>
    %28 = arith.maximumf %26, %27 : vector<5x512xf32>
    %29 = vector.extract_strided_slice %1 {offsets = [40, 0], sizes = [3, 5], strides = [1, 1]} : vector<48x17xf32> to vector<3x5xf32>
    %30 = vector.extract_strided_slice %1 {offsets = [40, 16], sizes = [3, 1], strides = [1, 1]} : vector<48x17xf32> to vector<3x1xf32>
    %cst_8 = arith.constant dense<0.000000e+00> : vector<3x512xf32>
    %31 = tpu.matmul %29, %28, %cst_8 {dimension_numbers = #tpu.dot_dimension_numbers<[1], [0], [0], [1], [0, 0, 1, 1], [], []>} : vector<3x5xf32>, vector<5x512xf32>, vector<3x512xf32> -> vector<3x512xf32>
    %32 = vector.broadcast %30 : vector<3x1xf32> to vector<3x512xf32>
    %33 = arith.addf %31, %32 : vector<3x512xf32>
    %c0_9 = arith.constant 0 : index
    %c0_10 = arith.constant 0 : index
    %34 = vector.load %arg3[%c0_9, %c0_10] : memref<3x512xf32, #tpu.memory_space<vmem>>, vector<3x512xf32>
    tpu.vector_store %arg3[%c0_9, %c0_10], %33 {strides = array<i32>} : memref<3x512xf32, #tpu.memory_space<vmem>>, vector<3x512xf32>,
    return
  }
  func.func @transform_0(%arg0: i32) -> (i32, i32) {
    %c0_i32 = arith.constant 0 : i32
    %c0_i32_0 = arith.constant 0 : i32
    return %arg0, %c0_i32 : i32, i32
  }
  func.func @transform_1(%arg0: i32) -> (i32, i32) {
    %c0_i32 = arith.constant 0 : i32
    %c0_i32_0 = arith.constant 0 : i32
    %c0_i32_1 = arith.constant 0 : i32
    return %c0_i32, %c0_i32_0 : i32, i32
  }
  func.func @transform_2(%arg0: i32) -> (i32, i32) {
    %c0_i32 = arith.constant 0 : i32
    %c0_i32_0 = arith.constant 0 : i32
    return %c0_i32, %arg0 : i32, i32
  }
}

</mosaic_0001>

<llo_original>
// kernel: tpu_custom_call.1
$region0: #{tpu_custom_call.1}
  #allocation0 [shape = 'u32[]', space=smem, size = 0x4, offset = 0x4, fixed_abs, tag = 'smem constant byte address 0x4 - core index']
  #allocation1 [shape = 'u32[144,128]{1,0:T(1,128)}', space=vmem, size = 0x12000, scoped, tag = 'internal scratch']
  %s0 = inlined_call_operand.vmem [shape: f32[512,16], index: 0, kind: input, shape index: {}]
  %s1 = inlined_call_operand.vmem [shape: f32[48,17], index: 1, kind: input, shape index: {}]
  %s2 = inlined_call_operand.hbm [shape: f32[3,512], index: 2, kind: output, shape index: {}]
  %s3 = sld [smem:[#allocation0]]
  $region18: #{tpu_custom_call.1} parent=0
    _
  %s5 = ssub.s32 1, %s3
  %s6 = scalar_select 0, %s5, %s3
  $region1: #{tpu_custom_call.1} parent=0
    #allocation2 [shape = 'u8[8192]{0}', space=vmem, size = 0x2000, scoped, tag = 'output window, operand 0, single buffered']
    #allocation3 [shape = 's32[1]{0}', space=sflag, size = 0x4, scoped, tag = 'scoped memory for tpu_custom_call.1']
    %7 = vsyncpa [#allocation3], 0
    // Predicated region
    $region2: #{tpu_custom_call.1} parent=1 // pred_check
      _
    $region3: #{tpu_custom_call.1} parent=1 // pred_check_branch
      %9 = sbr.rel (0) target = $region5
    $region4: #{tpu_custom_call.1} parent=1 // pred_region
      _
    $region5: #{tpu_custom_call.1} parent=1 // pred_fallthru
      _
    // Predicated region
    $region6: #{tpu_custom_call.1} parent=1 // pred_check
      _
    $region7: #{tpu_custom_call.1} parent=1 // pred_check_branch
      %11 = sbr.rel (0) target = $region9
    $region8: #{tpu_custom_call.1} parent=1 // pred_region
      _
    $region9: #{tpu_custom_call.1} parent=1 // pred_fallthru
      _
    %v12 = vld [vmem:[%s0] sm:$0xff]
    %v13 = vld [vmem:[%s0 + $0x8] sm:$0xff]
    %v14 = vld [vmem:[%s0 + $0x10] sm:$0xff]
    %v15 = vld [vmem:[%s0 + $0x18] sm:$0xff]
    %v16 = vld [vmem:[%s0 + $0x20] sm:$0xff]
    %v17 = vld [vmem:[%s0 + $0x28] sm:$0xff]
    %v18 = vld [vmem:[%s0 + $0x30] sm:$0xff]
    %v19 = vld [vmem:[%s0 + $0x38] sm:$0xff]
    %v20 = vld [vmem:[%s0 + $0x40] sm:$0xff]
    %v21 = vld [vmem:[%s0 + $0x48] sm:$0xff]
    %v22 = vld [vmem:[%s0 + $0x50] sm:$0xff]
    %v23 = vld [vmem:[%s0 + $0x58] sm:$0xff]
    %v24 = vld [vmem:[%s0 + $0x60] sm:$0xff]
    %v25 = vld [vmem:[%s0 + $0x68] sm:$0xff]
    %v26 = vld [vmem:[%s0 + $0x70] sm:$0xff]
    %v27 = vld [vmem:[%s0 + $0x78] sm:$0xff]
    %v28 = vld [vmem:[%s0 + $0x80] sm:$0xff]
    %v29 = vld [vmem:[%s0 + $0x88] sm:$0xff]
    %v30 = vld [vmem:[%s0 + $0x90] sm:$0xff]
    %v31 = vld [vmem:[%s0 + $0x98] sm:$0xff]
    %v32 = vld [vmem:[%s0 + $0xa0] sm:$0xff]
    %v33 = vld [vmem:[%s0 + $0xa8] sm:$0xff]
    %v34 = vld [vmem:[%s0 + $0xb0] sm:$0xff]
    %v35 = vld [vmem:[%s0 + $0xb8] sm:$0xff]
    %v36 = vld [vmem:[%s0 + $0xc0] sm:$0xff]
    %v37 = vld [vmem:[%s0 + $0xc8] sm:$0xff]
    %v38 = vld [vmem:[%s0 + $0xd0] sm:$0xff]
    %v39 = vld [vmem:[%s0 + $0xd8] sm:$0xff]
    %v40 = vld [vmem:[%s0 + $0xe0] sm:$0xff]
    %v41 = vld [vmem:[%s0 + $0xe8] sm:$0xff]
    %v42 = vld [vmem:[%s0 + $0xf0] sm:$0xff]
    %v43 = vld [vmem:[%s0 + $0xf8] sm:$0xff]
    %v44 = vld [vmem:[%s0 + $0x100] sm:$0xff]
    %v45 = vld [vmem:[%s0 + $0x108] sm:$0xff]
    %v46 = vld [vmem:[%s0 + $0x110] sm:$0xff]
    %v47 = vld [vmem:[%s0 + $0x118] sm:$0xff]
    %v48 = vld [vmem:[%s0 + $0x120] sm:$0xff]
    %v49 = vld [vmem:[%s0 + $0x128] sm:$0xff]
    %v50 = vld [vmem:[%s0 + $0x130] sm:$0xff]
    %v51 = vld [vmem:[%s0 + $0x138] sm:$0xff]
    %v52 = vld [vmem:[%s0 + $0x140] sm:$0xff]
    %v53 = vld [vmem:[%s0 + $0x148] sm:$0xff]
    %v54 = vld [vmem:[%s0 + $0x150] sm:$0xff]
    %v55 = vld [vmem:[%s0 + $0x158] sm:$0xff]
    %v56 = vld [vmem:[%s0 + $0x160] sm:$0xff]
    %v57 = vld [vmem:[%s0 + $0x168] sm:$0xff]
    %v58 = vld [vmem:[%s0 + $0x170] sm:$0xff]
    %v59 = vld [vmem:[%s0 + $0x178] sm:$0xff]
    %v60 = vld [vmem:[%s0 + $0x180] sm:$0xff]
    %v61 = vld [vmem:[%s0 + $0x188] sm:$0xff]
    %v62 = vld [vmem:[%s0 + $0x190] sm:$0xff]
    %v63 = vld [vmem:[%s0 + $0x198] sm:$0xff]
    %v64 = vld [vmem:[%s0 + $0x1a0] sm:$0xff]
    %v65 = vld [vmem:[%s0 + $0x1a8] sm:$0xff]
    %v66 = vld [vmem:[%s0 + $0x1b0] sm:$0xff]
    %v67 = vld [vmem:[%s0 + $0x1b8] sm:$0xff]
    %v68 = vld [vmem:[%s0 + $0x1c0] sm:$0xff]
    %v69 = vld [vmem:[%s0 + $0x1c8] sm:$0xff]
    %v70 = vld [vmem:[%s0 + $0x1d0] sm:$0xff]
    %v71 = vld [vmem:[%s0 + $0x1d8] sm:$0xff]
    %v72 = vld [vmem:[%s0 + $0x1e0] sm:$0xff]
    %v73 = vld [vmem:[%s0 + $0x1e8] sm:$0xff]
    %v74 = vld [vmem:[%s0 + $0x1f0] sm:$0xff]
    %v75 = vld [vmem:[%s0 + $0x1f8] sm:$0xff]
    %v76 = vld [vmem:[%s1] sm:$0xff]
    %v77 = vld [vmem:[%s1 + $0x8] sm:$0xff]
    %v78 = vld [vmem:[%s1 + $0x10] sm:$0xff]
    %v79 = vld [vmem:[%s1 + $0x18] sm:$0xff]
    %v80 = vld [vmem:[%s1 + $0x20] sm:$0xff]
    %v81 = vld [vmem:[%s1 + $0x28] sm:$0xff]
    %83 = vset.pattern.permute.xlu0 16
    %84 = vperm.xlu0 %83, %v76
    %v85 = vpop.permute.xlu0 %84
    %88 = vset.pattern.permute.xlu0 16
    %89 = vperm.xlu0 %88, %v77
    %v90 = vpop.permute.xlu0 %89
    %vm92 = vcmask 130048
    %v93 = vsel %vm92, %v76, 0
    %v95 = vsel %vm92, %v77, 0
    %v98 = vsel %vm92, %v12, 0
    %v101 = vsel %vm92, %v13, 0
    %v104 = vsel %vm92, %v14, 0
    %v107 = vsel %vm92, %v15, 0
    %v110 = vsel %vm92, %v16, 0
    %v113 = vsel %vm92, %v17, 0
    %v116 = vsel %vm92, %v18, 0
    %v119 = vsel %vm92, %v19, 0
    %v122 = vsel %vm92, %v20, 0
    %v125 = vsel %vm92, %v21, 0
    %v128 = vsel %vm92, %v22, 0
    %v131 = vsel %vm92, %v23, 0
    %v134 = vsel %vm92, %v24, 0
    %v137 = vsel %vm92, %v25, 0
    %v140 = vsel %vm92, %v26, 0
    %v143 = vsel %vm92, %v27, 0
    %v146 = vsel %vm92, %v28, 0
    %v149 = vsel %vm92, %v29, 0
    %v152 = vsel %vm92, %v30, 0
    %v155 = vsel %vm92, %v31, 0
    %v158 = vsel %vm92, %v32, 0
    %v161 = vsel %vm92, %v33, 0
    %v164 = vsel %vm92, %v34, 0
    %v167 = vsel %vm92, %v35, 0
    %v170 = vsel %vm92, %v36, 0
    %v173 = vsel %vm92, %v37, 0
    %v176 = vsel %vm92, %v38, 0
    %v179 = vsel %vm92, %v39, 0
    %v182 = vsel %vm92, %v40, 0
    %v185 = vsel %vm92, %v41, 0
    %v188 = vsel %vm92, %v42, 0
    %v191 = vsel %vm92, %v43, 0
    %v194 = vsel %vm92, %v44, 0
    %v197 = vsel %vm92, %v45, 0
    %v200 = vsel %vm92, %v46, 0
    %v203 = vsel %vm92, %v47, 0
    %v206 = vsel %vm92, %v48, 0
    %v209 = vsel %vm92, %v49, 0
    %v212 = vsel %vm92, %v50, 0
    %v215 = vsel %vm92, %v51, 0
    %v218 = vsel %vm92, %v52, 0
    %v221 = vsel %vm92, %v53, 0
    %v224 = vsel %vm92, %v54, 0
    %v227 = vsel %vm92, %v55, 0
    %v230 = vsel %vm92, %v56, 0
    %v233 = vsel %vm92, %v57, 0
    %v236 = vsel %vm92, %v58, 0
    %v239 = vsel %vm92, %v59, 0
    %v242 = vsel %vm92, %v60, 0
    %v245 = vsel %vm92, %v61, 0
    %v248 = vsel %vm92, %v62, 0
    %v251 = vsel %vm92, %v63, 0
    %v254 = vsel %vm92, %v64, 0
    %v257 = vsel %vm92, %v65, 0
    %v260 = vsel %vm92, %v66, 0
    %v263 = vsel %vm92, %v67, 0
    %v266 = vsel %vm92, %v68, 0
    %v269 = vsel %vm92, %v69, 0
    %v272 = vsel %vm92, %v70, 0
    %v275 = vsel %vm92, %v71, 0
    %v278 = vsel %vm92, %v72, 0
    %v281 = vsel %vm92, %v73, 0
    %v284 = vsel %vm92, %v74, 0
    %v287 = vsel %vm92, %v75, 0
    %289 = vmatprep.subr.mxu0 0.0
    %290 = vmatpush1.xpose.msra.mxu0 %v143
    %291 = vmatprep.subr.mxu0 0.0
    %292 = vmatpush1.xpose.msra.mxu0 %v140
    %293 = vmatprep.subr.mxu0 0.0
    %294 = vmatpush1.xpose.msra.mxu0 %v137
    %295 = vmatprep.subr.mxu0 0.0
    %296 = vmatpush1.xpose.msra.mxu0 %v134
    %297 = vmatprep.subr.mxu0 0.0
    %298 = vmatpush1.xpose.msra.mxu0 %v131
    %299 = vmatprep.subr.mxu0 0.0
    %300 = vmatpush1.xpose.msra.mxu0 %v128
    %301 = vmatprep.subr.mxu0 0.0
    %302 = vmatpush1.xpose.msra.mxu0 %v125
    %303 = vmatprep.subr.mxu0 0.0
    %304 = vmatpush1.xpose.msra.mxu0 %v122
    %305 = vmatprep.subr.mxu0 0.0
    %306 = vmatpush1.xpose.msra.mxu0 %v119
    %307 = vmatprep.subr.mxu0 0.0
    %308 = vmatpush1.xpose.msra.mxu0 %v116
    %309 = vmatprep.subr.mxu0 0.0
    %310 = vmatpush1.xpose.msra.mxu0 %v113
    %311 = vmatprep.subr.mxu0 0.0
    %312 = vmatpush1.xpose.msra.mxu0 %v110
    %313 = vmatprep.subr.mxu0 0.0
    %314 = vmatpush1.xpose.msra.mxu0 %v107
    %315 = vmatprep.subr.mxu0 0.0
    %316 = vmatpush1.xpose.msra.mxu0 %v104
    %317 = vmatprep.subr.mxu0 0.0
    %318 = vmatpush1.xpose.msra.mxu0 %v101
    %319 = vmatprep.subr.mxu0 0.0
    %320 = vmatpush1.xpose.msra.mxu0 %v98
    %321 = vmatprep.subr.mxu0 0.0
    %322 = vmatpush2.xpose.msra.mxu0 %v191
    %323 = vmatprep.subr.mxu0 0.0
    %324 = vmatpush2.xpose.msra.mxu0 %v188
    %325 = vmatprep.subr.mxu0 0.0
    %326 = vmatpush2.xpose.msra.mxu0 %v185
    %327 = vmatprep.subr.mxu0 0.0
    %328 = vmatpush2.xpose.msra.mxu0 %v182
    %329 = vmatprep.subr.mxu0 0.0
    %330 = vmatpush2.xpose.msra.mxu0 %v179
    %331 = vmatprep.subr.mxu0 0.0
    %332 = vmatpush2.xpose.msra.mxu0 %v176
    %333 = vmatprep.subr.mxu0 0.0
    %334 = vmatpush2.xpose.msra.mxu0 %v173
    %335 = vmatprep.subr.mxu0 0.0
    %336 = vmatpush2.xpose.msra.mxu0 %v170
    %337 = vmatprep.subr.mxu0 0.0
    %338 = vmatpush2.xpose.msra.mxu0 %v167
    %339 = vmatprep.subr.mxu0 0.0
    %340 = vmatpush2.xpose.msra.mxu0 %v164
    %341 = vmatprep.subr.mxu0 0.0
    %342 = vmatpush2.xpose.msra.mxu0 %v161
    %343 = vmatprep.subr.mxu0 0.0
    %344 = vmatpush2.xpose.msra.mxu0 %v158
    %345 = vmatprep.subr.mxu0 0.0
    %346 = vmatpush2.xpose.msra.mxu0 %v155
    %347 = vmatprep.subr.mxu0 0.0
    %348 = vmatpush2.xpose.msra.mxu0 %v152
    %349 = vmatprep.subr.mxu0 0.0
    %350 = vmatpush2.xpose.msra.mxu0 %v149
    %351 = vmatprep.subr.mxu0 0.0
    %352 = vmatpush2.xpose.msra.mxu0 %v146
    %353 = vmatprep.mubr.f32.mxu0 0.0
    %354 = vmatmul.mubr.f32.gmra.mxu0 %v93
    %v355 = vpop.f32.mrf.mxu0
    %v356 = vadd.f32 %v85, %v355
    %v357 = vpop.f32.mrf.mxu0
    %v358 = vadd.f32 %v85, %v357
    %359 = vmatprep.mubr.f32.mxu0 0.0
    %360 = vmatmul.mubr.f32.gmra.mxu0 %v95
    %v361 = vpop.f32.mrf.mxu0
    %v362 = vadd.f32 %v90, %v361
    %v363 = vpop.f32.mrf.mxu0
    %v364 = vadd.f32 %v90, %v363
    %365 = vdwg.mxu0
    %366 = vmatprep.subr.mxu0 0.0
    %367 = vmatpush1.xpose.msra.mxu0 %v239
    %368 = vmatprep.subr.mxu0 0.0
    %369 = vmatpush1.xpose.msra.mxu0 %v236
    %370 = vmatprep.subr.mxu0 0.0
    %371 = vmatpush1.xpose.msra.mxu0 %v233
    %372 = vmatprep.subr.mxu0 0.0
    %373 = vmatpush1.xpose.msra.mxu0 %v230
    %374 = vmatprep.subr.mxu0 0.0
    %375 = vmatpush1.xpose.msra.mxu0 %v227
    %376 = vmatprep.subr.mxu0 0.0
    %377 = vmatpush1.xpose.msra.mxu0 %v224
    %378 = vmatprep.subr.mxu0 0.0
    %379 = vmatpush1.xpose.msra.mxu0 %v221
    %380 = vmatprep.subr.mxu0 0.0
    %381 = vmatpush1.xpose.msra.mxu0 %v218
    %382 = vmatprep.subr.mxu0 0.0
    %383 = vmatpush1.xpose.msra.mxu0 %v215
    %384 = vmatprep.subr.mxu0 0.0
    %385 = vmatpush1.xpose.msra.mxu0 %v212
    %386 = vmatprep.subr.mxu0 0.0
    %387 = vmatpush1.xpose.msra.mxu0 %v209
    %388 = vmatprep.subr.mxu0 0.0
    %389 = vmatpush1.xpose.msra.mxu0 %v206
    %390 = vmatprep.subr.mxu0 0.0
    %391 = vmatpush1.xpose.msra.mxu0 %v203
    %392 = vmatprep.subr.mxu0 0.0
    %393 = vmatpush1.xpose.msra.mxu0 %v200
    %394 = vmatprep.subr.mxu0 0.0
    %395 = vmatpush1.xpose.msra.mxu0 %v197
    %396 = vmatprep.subr.mxu0 0.0
    %397 = vmatpush1.xpose.msra.mxu0 %v194
    %398 = vmatprep.subr.mxu0 0.0
    %399 = vmatpush2.xpose.msra.mxu0 %v287
    %400 = vmatprep.subr.mxu0 0.0
    %401 = vmatpush2.xpose.msra.mxu0 %v284
    %402 = vmatprep.subr.mxu0 0.0
    %403 = vmatpush2.xpose.msra.mxu0 %v281
    %404 = vmatprep.subr.mxu0 0.0
    %405 = vmatpush2.xpose.msra.mxu0 %v278
    %406 = vmatprep.subr.mxu0 0.0
    %407 = vmatpush2.xpose.msra.mxu0 %v275
    %408 = vmatprep.subr.mxu0 0.0
    %409 = vmatpush2.xpose.msra.mxu0 %v272
    %410 = vmatprep.subr.mxu0 0.0
    %411 = vmatpush2.xpose.msra.mxu0 %v269
    %412 = vmatprep.subr.mxu0 0.0
    %413 = vmatpush2.xpose.msra.mxu0 %v266
    %414 = vmatprep.subr.mxu0 0.0
    %415 = vmatpush2.xpose.msra.mxu0 %v263
    %416 = vmatprep.subr.mxu0 0.0
    %417 = vmatpush2.xpose.msra.mxu0 %v260
    %418 = vmatprep.subr.mxu0 0.0
    %419 = vmatpush2.xpose.msra.mxu0 %v257
    %420 = vmatprep.subr.mxu0 0.0
    %421 = vmatpush2.xpose.msra.mxu0 %v254
    %422 = vmatprep.subr.mxu0 0.0
    %423 = vmatpush2.xpose.msra.mxu0 %v251
    %424 = vmatprep.subr.mxu0 0.0
    %425 = vmatpush2.xpose.msra.mxu0 %v248
    %426 = vmatprep.subr.mxu0 0.0
    %427 = vmatpush2.xpose.msra.mxu0 %v245
    %428 = vmatprep.subr.mxu0 0.0
    %429 = vmatpush2.xpose.msra.mxu0 %v242
    %430 = vmatprep.mubr.f32.mxu0 0.0
    %431 = vmatmul.mubr.f32.gmra.mxu0 %v93
    %v432 = vpop.f32.mrf.mxu0
    %v433 = vadd.f32 %v85, %v432
    %v434 = vpop.f32.mrf.mxu0
    %v435 = vadd.f32 %v85, %v434
    %436 = vmatprep.mubr.f32.mxu0 0.0
    %437 = vmatmul.mubr.f32.gmra.mxu0 %v95
    %v438 = vpop.f32.mrf.mxu0
    %v439 = vadd.f32 %v90, %v438
    %v440 = vpop.f32.mrf.mxu0
    %v441 = vadd.f32 %v90, %v440
    %442 = vdwg.mxu0
    %v443 = vxor.u32 %v356, 2147483648
    %v444 = vxor.u32 %v358, 2147483648
    %v445 = vxor.u32 %v433, 2147483648
    %v446 = vxor.u32 %v435, 2147483648
    %v447 = vxor.u32 %v362, 2147483648
    %v448 = vxor.u32 %v364, 2147483648
    %v449 = vxor.u32 %v439, 2147483648
    %v450 = vxor.u32 %v441, 2147483648
    %v451 = vmul.f32 %v443, 1.442695
    %v452 = vpow.pop %v451
    %v453 = vmul.f32 %v444, 1.442695
    %v454 = vpow.pop %v453
    %v455 = vmul.f32 %v445, 1.442695
    %v456 = vpow.pop %v455
    %v457 = vmul.f32 %v446, 1.442695
    %v458 = vpow.pop %v457
    %v459 = vmul.f32 %v447, 1.442695
    %v460 = vpow.pop %v459
    %v461 = vmul.f32 %v448, 1.442695
    %v462 = vpow.pop %v461
    %v463 = vmul.f32 %v449, 1.442695
    %v464 = vpow.pop %v463
    %v465 = vmul.f32 %v450, 1.442695
    %v466 = vpow.pop %v465
    %v467 = vadd.f32 %v452, 1.0
    %v468 = vadd.f32 %v454, 1.0
    %v469 = vadd.f32 %v456, 1.0
    %v470 = vadd.f32 %v458, 1.0
    %v471 = vadd.f32 %v460, 1.0
    %v472 = vadd.f32 %v462, 1.0
    %v473 = vadd.f32 %v464, 1.0
    %v474 = vadd.f32 %v466, 1.0
    %v475 = vrcp.pop %v467
    %v476 = vmul.f32 1.0, %v475
    %v477 = vrcp.pop %v468
    %v478 = vmul.f32 1.0, %v477
    %v479 = vrcp.pop %v469
    %v480 = vmul.f32 1.0, %v479
    %v481 = vrcp.pop %v470
    %v482 = vmul.f32 1.0, %v481
    %v483 = vrcp.pop %v471
    %v484 = vmul.f32 1.0, %v483
    %v485 = vrcp.pop %v472
    %v486 = vmul.f32 1.0, %v485
    %v487 = vrcp.pop %v473
    %v488 = vmul.f32 1.0, %v487
    %v489 = vrcp.pop %v474
    %v490 = vmul.f32 1.0, %v489
    %492 = vset.pattern.permute.xlu0 16
    %493 = vperm.xlu0 %492, %v78
    %v494 = vpop.permute.xlu0 %493
    %497 = vset.pattern.permute.xlu0 16
    %498 = vperm.xlu0 %497, %v79
    %v499 = vpop.permute.xlu0 %498
    %vm501 = vcmask 80896
    %v502 = vsel %vm501, %v78, 0
    %v504 = vsel %vm501, %v79, 0
    %vm506 = vcmask 1041408
    %v508 = vsel %vm506, %v484, 0
    %v511 = vsel %vm506, %v486, 0
    %v514 = vsel %vm506, %v488, 0
    %v517 = vsel %vm506, %v490, 0
    %519 = vmatprep.subr.mxu0 0.0
    %520 = vmatpush1.msra.mxu0 0.0
    %521 = vmatprep.subr.mxu0 0.0
    %522 = vmatpush1.msra.mxu0 0.0
    %523 = vmatprep.subr.mxu0 0.0
    %524 = vmatpush1.msra.mxu0 0.0
    %525 = vmatprep.subr.mxu0 0.0
    %526 = vmatpush1.msra.mxu0 0.0
    %527 = vmatprep.subr.mxu0 0.0
    %528 = vmatpush1.msra.mxu0 0.0
    %529 = vmatprep.subr.mxu0 0.0
    %530 = vmatpush1.msra.mxu0 0.0
    %531 = vmatprep.subr.mxu0 0.0
    %532 = vmatpush1.msra.mxu0 0.0
    %533 = vmatprep.subr.mxu0 0.0
    %534 = vmatpush1.msra.mxu0 0.0
    %535 = vmatprep.subr.mxu0 0.0
    %536 = vmatpush1.msra.mxu0 0.0
    %537 = vmatprep.subr.mxu0 0.0
    %538 = vmatpush1.msra.mxu0 0.0
    %539 = vmatprep.subr.mxu0 0.0
    %540 = vmatpush1.msra.mxu0 0.0
    %541 = vmatprep.subr.mxu0 0.0
    %542 = vmatpush1.msra.mxu0 0.0
    %543 = vmatprep.subr.mxu0 0.0
    %544 = vmatpush1.msra.mxu0 0.0
    %545 = vmatprep.subr.mxu0 0.0
    %546 = vmatpush1.msra.mxu0 0.0
    %547 = vmatprep.subr.mxu0 %v511
    %548 = vmatpush1.msra.mxu0 %v508
    %549 = vmatprep.subr.mxu0 %v478
    %550 = vmatpush1.msra.mxu0 %v476
    %551 = vmatprep.subr.mxu0 0.0
    %552 = vmatpush2.msra.mxu0 0.0
    %553 = vmatprep.subr.mxu0 0.0
    %554 = vmatpush2.msra.mxu0 0.0
    %555 = vmatprep.subr.mxu0 0.0
    %556 = vmatpush2.msra.mxu0 0.0
    %557 = vmatprep.subr.mxu0 0.0
    %558 = vmatpush2.msra.mxu0 0.0
    %559 = vmatprep.subr.mxu0 0.0
    %560 = vmatpush2.msra.mxu0 0.0
    %561 = vmatprep.subr.mxu0 0.0
    %562 = vmatpush2.msra.mxu0 0.0
    %563 = vmatprep.subr.mxu0 0.0
    %564 = vmatpush2.msra.mxu0 0.0
    %565 = vmatprep.subr.mxu0 0.0
    %566 = vmatpush2.msra.mxu0 0.0
    %567 = vmatprep.subr.mxu0 0.0
    %568 = vmatpush2.msra.mxu0 0.0
    %569 = vmatprep.subr.mxu0 0.0
    %570 = vmatpush2.msra.mxu0 0.0
    %571 = vmatprep.subr.mxu0 0.0
    %572 = vmatpush2.msra.mxu0 0.0
    %573 = vmatprep.subr.mxu0 0.0
    %574 = vmatpush2.msra.mxu0 0.0
    %575 = vmatprep.subr.mxu0 0.0
    %576 = vmatpush2.msra.mxu0 0.0
    %577 = vmatprep.subr.mxu0 0.0
    %578 = vmatpush2.msra.mxu0 0.0
    %579 = vmatprep.subr.mxu0 0.0
    %580 = vmatpush2.msra.mxu0 0.0
    %581 = vmatprep.subr.mxu0 0.0
    %582 = vmatpush2.msra.mxu0 0.0
    %583 = vmatprep.mubr.f32.mxu0 0.0
    %584 = vmatmul.mubr.f32.gmra.mxu0 %v502
    %v585 = vpop.f32.mrf.mxu0
    %v586 = vadd.f32 %v494, %v585
    %v587 = vpop.f32.mrf.mxu0
    %v588 = vadd.f32 %v494, %v587
    %589 = vmatprep.mubr.f32.mxu0 0.0
    %590 = vmatmul.mubr.f32.gmra.mxu0 %v504
    %v591 = vpop.f32.mrf.mxu0
    %v592 = vadd.f32 %v499, %v591
    %v593 = vpop.f32.mrf.mxu0
    %v594 = vadd.f32 %v499, %v593
    %595 = vdwg.mxu0
    %596 = vmatprep.subr.mxu0 0.0
    %597 = vmatpush1.msra.mxu0 0.0
    %598 = vmatprep.subr.mxu0 0.0
    %599 = vmatpush1.msra.mxu0 0.0
    %600 = vmatprep.subr.mxu0 0.0
    %601 = vmatpush1.msra.mxu0 0.0
    %602 = vmatprep.subr.mxu0 0.0
    %603 = vmatpush1.msra.mxu0 0.0
    %604 = vmatprep.subr.mxu0 0.0
    %605 = vmatpush1.msra.mxu0 0.0
    %606 = vmatprep.subr.mxu0 0.0
    %607 = vmatpush1.msra.mxu0 0.0
    %608 = vmatprep.subr.mxu0 0.0
    %609 = vmatpush1.msra.mxu0 0.0
    %610 = vmatprep.subr.mxu0 0.0
    %611 = vmatpush1.msra.mxu0 0.0
    %612 = vmatprep.subr.mxu0 0.0
    %613 = vmatpush1.msra.mxu0 0.0
    %614 = vmatprep.subr.mxu0 0.0
    %615 = vmatpush1.msra.mxu0 0.0
    %616 = vmatprep.subr.mxu0 0.0
    %617 = vmatpush1.msra.mxu0 0.0
    %618 = vmatprep.subr.mxu0 0.0
    %619 = vmatpush1.msra.mxu0 0.0
    %620 = vmatprep.subr.mxu0 0.0
    %621 = vmatpush1.msra.mxu0 0.0
    %622 = vmatprep.subr.mxu0 0.0
    %623 = vmatpush1.msra.mxu0 0.0
    %624 = vmatprep.subr.mxu0 %v517
    %625 = vmatpush1.msra.mxu0 %v514
    %626 = vmatprep.subr.mxu0 %v482
    %627 = vmatpush1.msra.mxu0 %v480
    %628 = vmatprep.subr.mxu0 0.0
    %629 = vmatpush2.msra.mxu0 0.0
    %630 = vmatprep.subr.mxu0 0.0
    %631 = vmatpush2.msra.mxu0 0.0
    %632 = vmatprep.subr.mxu0 0.0
    %633 = vmatpush2.msra.mxu0 0.0
    %634 = vmatprep.subr.mxu0 0.0
    %635 = vmatpush2.msra.mxu0 0.0
    %636 = vmatprep.subr.mxu0 0.0
    %637 = vmatpush2.msra.mxu0 0.0
    %638 = vmatprep.subr.mxu0 0.0
    %639 = vmatpush2.msra.mxu0 0.0
    %640 = vmatprep.subr.mxu0 0.0
    %641 = vmatpush2.msra.mxu0 0.0
    %642 = vmatprep.subr.mxu0 0.0
    %643 = vmatpush2.msra.mxu0 0.0
    %644 = vmatprep.subr.mxu0 0.0
    %645 = vmatpush2.msra.mxu0 0.0
    %646 = vmatprep.subr.mxu0 0.0
    %647 = vmatpush2.msra.mxu0 0.0
    %648 = vmatprep.subr.mxu0 0.0
    %649 = vmatpush2.msra.mxu0 0.0
    %650 = vmatprep.subr.mxu0 0.0
    %651 = vmatpush2.msra.mxu0 0.0
    %652 = vmatprep.subr.mxu0 0.0
    %653 = vmatpush2.msra.mxu0 0.0
    %654 = vmatprep.subr.mxu0 0.0
    %655 = vmatpush2.msra.mxu0 0.0
    %656 = vmatprep.subr.mxu0 0.0
    %657 = vmatpush2.msra.mxu0 0.0
    %658 = vmatprep.subr.mxu0 0.0
    %659 = vmatpush2.msra.mxu0 0.0
    %660 = vmatprep.mubr.f32.mxu0 0.0
    %661 = vmatmul.mubr.f32.gmra.mxu0 %v502
    %v662 = vpop.f32.mrf.mxu0
    %v663 = vadd.f32 %v494, %v662
    %v664 = vpop.f32.mrf.mxu0
    %v665 = vadd.f32 %v494, %v664
    %666 = vmatprep.mubr.f32.mxu0 0.0
    %667 = vmatmul.mubr.f32.gmra.mxu0 %v504
    %v668 = vpop.f32.mrf.mxu0
    %v669 = vadd.f32 %v499, %v668
    %v670 = vpop.f32.mrf.mxu0
    %v671 = vadd.f32 %v499, %v670
    %672 = vdwg.mxu0
    %v673 = vxor.u32 %v586, 2147483648
    %v674 = vxor.u32 %v588, 2147483648
    %v675 = vxor.u32 %v663, 2147483648
    %v676 = vxor.u32 %v665, 2147483648
    %v677 = vxor.u32 %v592, 2147483648
    %v678 = vxor.u32 %v594, 2147483648
    %v679 = vxor.u32 %v669, 2147483648
    %v680 = vxor.u32 %v671, 2147483648
    %v681 = vmul.f32 %v673, 1.442695
    %v682 = vpow.pop %v681
    %v683 = vmul.f32 %v674, 1.442695
    %v684 = vpow.pop %v683
    %v685 = vmul.f32 %v675, 1.442695
    %v686 = vpow.pop %v685
    %v687 = vmul.f32 %v676, 1.442695
    %v688 = vpow.pop %v687
    %v689 = vmul.f32 %v677, 1.442695
    %v690 = vpow.pop %v689
    %v691 = vmul.f32 %v678, 1.442695
    %v692 = vpow.pop %v691
    %v693 = vmul.f32 %v679, 1.442695
    %v694 = vpow.pop %v693
    %v695 = vmul.f32 %v680, 1.442695
    %v696 = vpow.pop %v695
    %v697 = vadd.f32 %v682, 1.0
    %v698 = vadd.f32 %v684, 1.0
    %v699 = vadd.f32 %v686, 1.0
    %v700 = vadd.f32 %v688, 1.0
    %v701 = vadd.f32 %v690, 1.0
    %v702 = vadd.f32 %v692, 1.0
    %v703 = vadd.f32 %v694, 1.0
    %v704 = vadd.f32 %v696, 1.0
    %v705 = vrcp.pop %v697
    %v706 = vmul.f32 1.0, %v705
    %v707 = vrcp.pop %v698
    %v708 = vmul.f32 1.0, %v707
    %v709 = vrcp.pop %v699
    %v710 = vmul.f32 1.0, %v709
    %v711 = vrcp.pop %v700
    %v712 = vmul.f32 1.0, %v711
    %v713 = vrcp.pop %v701
    %v714 = vmul.f32 1.0, %v713
    %v715 = vrcp.pop %v702
    %v716 = vmul.f32 1.0, %v715
    %v717 = vrcp.pop %v703
    %v718 = vmul.f32 1.0, %v717
    %v719 = vrcp.pop %v704
    %v720 = vmul.f32 1.0, %v719
    %722 = vset.pattern.permute.xlu0 16
    %723 = vperm.xlu0 %722, %v80
    %v724 = vpop.permute.xlu0 %723
    %vm726 = vcmask 121856
    %v727 = vsel %vm726, %v80, 0
    %vm729 = vcmask 1046528
    %v731 = vsel %vm729, %v714, 0
    %v734 = vsel %vm729, %v716, 0
    %v737 = vsel %vm729, %v718, 0
    %v740 = vsel %vm729, %v720, 0
    %742 = vmatprep.subr.mxu0 0.0
    %743 = vmatpush1.msra.mxu0 0.0
    %744 = vmatprep.subr.mxu0 0.0
    %745 = vmatpush1.msra.mxu0 0.0
    %746 = vmatprep.subr.mxu0 0.0
    %747 = vmatpush1.msra.mxu0 0.0
    %748 = vmatprep.subr.mxu0 0.0
    %749 = vmatpush1.msra.mxu0 0.0
    %750 = vmatprep.subr.mxu0 0.0
    %751 = vmatpush1.msra.mxu0 0.0
    %752 = vmatprep.subr.mxu0 0.0
    %753 = vmatpush1.msra.mxu0 0.0
    %754 = vmatprep.subr.mxu0 0.0
    %755 = vmatpush1.msra.mxu0 0.0
    %756 = vmatprep.subr.mxu0 0.0
    %757 = vmatpush1.msra.mxu0 0.0
    %758 = vmatprep.subr.mxu0 0.0
    %759 = vmatpush1.msra.mxu0 0.0
    %760 = vmatprep.subr.mxu0 0.0
    %761 = vmatpush1.msra.mxu0 0.0
    %762 = vmatprep.subr.mxu0 0.0
    %763 = vmatpush1.msra.mxu0 0.0
    %764 = vmatprep.subr.mxu0 0.0
    %765 = vmatpush1.msra.mxu0 0.0
    %766 = vmatprep.subr.mxu0 0.0
    %767 = vmatpush1.msra.mxu0 0.0
    %768 = vmatprep.subr.mxu0 0.0
    %769 = vmatpush1.msra.mxu0 0.0
    %770 = vmatprep.subr.mxu0 %v734
    %771 = vmatpush1.msra.mxu0 %v731
    %772 = vmatprep.subr.mxu0 %v708
    %773 = vmatpush1.msra.mxu0 %v706
    %774 = vmatprep.subr.mxu0 0.0
    %775 = vmatpush2.msra.mxu0 0.0
    %776 = vmatprep.subr.mxu0 0.0
    %777 = vmatpush2.msra.mxu0 0.0
    %778 = vmatprep.subr.mxu0 0.0
    %779 = vmatpush2.msra.mxu0 0.0
    %780 = vmatprep.subr.mxu0 0.0
    %781 = vmatpush2.msra.mxu0 0.0
    %782 = vmatprep.subr.mxu0 0.0
    %783 = vmatpush2.msra.mxu0 0.0
    %784 = vmatprep.subr.mxu0 0.0
    %785 = vmatpush2.msra.mxu0 0.0
    %786 = vmatprep.subr.mxu0 0.0
    %787 = vmatpush2.msra.mxu0 0.0
    %788 = vmatprep.subr.mxu0 0.0
    %789 = vmatpush2.msra.mxu0 0.0
    %790 = vmatprep.subr.mxu0 0.0
    %791 = vmatpush2.msra.mxu0 0.0
    %792 = vmatprep.subr.mxu0 0.0
    %793 = vmatpush2.msra.mxu0 0.0
    %794 = vmatprep.subr.mxu0 0.0
    %795 = vmatpush2.msra.mxu0 0.0
    %796 = vmatprep.subr.mxu0 0.0
    %797 = vmatpush2.msra.mxu0 0.0
    %798 = vmatprep.subr.mxu0 0.0
    %799 = vmatpush2.msra.mxu0 0.0
    %800 = vmatprep.subr.mxu0 0.0
    %801 = vmatpush2.msra.mxu0 0.0
    %802 = vmatprep.subr.mxu0 0.0
    %803 = vmatpush2.msra.mxu0 0.0
    %804 = vmatprep.subr.mxu0 0.0
    %805 = vmatpush2.msra.mxu0 0.0
    %806 = vmatprep.mubr.f32.mxu0 0.0
    %807 = vmatmul.mubr.f32.gmra.mxu0 %v727
    %v808 = vpop.f32.mrf.mxu0
    %v809 = vadd.f32 %v724, %v808
    %v810 = vpop.f32.mrf.mxu0
    %v811 = vadd.f32 %v724, %v810
    %812 = vdwg.mxu0
    %813 = vmatprep.subr.mxu0 0.0
    %814 = vmatpush1.msra.mxu0 0.0
    %815 = vmatprep.subr.mxu0 0.0
    %816 = vmatpush1.msra.mxu0 0.0
    %817 = vmatprep.subr.mxu0 0.0
    %818 = vmatpush1.msra.mxu0 0.0
    %819 = vmatprep.subr.mxu0 0.0
    %820 = vmatpush1.msra.mxu0 0.0
    %821 = vmatprep.subr.mxu0 0.0
    %822 = vmatpush1.msra.mxu0 0.0
    %823 = vmatprep.subr.mxu0 0.0
    %824 = vmatpush1.msra.mxu0 0.0
    %825 = vmatprep.subr.mxu0 0.0
    %826 = vmatpush1.msra.mxu0 0.0
    %827 = vmatprep.subr.mxu0 0.0
    %828 = vmatpush1.msra.mxu0 0.0
    %829 = vmatprep.subr.mxu0 0.0
    %830 = vmatpush1.msra.mxu0 0.0
    %831 = vmatprep.subr.mxu0 0.0
    %832 = vmatpush1.msra.mxu0 0.0
    %833 = vmatprep.subr.mxu0 0.0
    %834 = vmatpush1.msra.mxu0 0.0
    %835 = vmatprep.subr.mxu0 0.0
    %836 = vmatpush1.msra.mxu0 0.0
    %837 = vmatprep.subr.mxu0 0.0
    %838 = vmatpush1.msra.mxu0 0.0
    %839 = vmatprep.subr.mxu0 0.0
    %840 = vmatpush1.msra.mxu0 0.0
    %841 = vmatprep.subr.mxu0 %v740
    %842 = vmatpush1.msra.mxu0 %v737
    %843 = vmatprep.subr.mxu0 %v712
    %844 = vmatpush1.msra.mxu0 %v710
    %845 = vmatprep.subr.mxu0 0.0
    %846 = vmatpush2.msra.mxu0 0.0
    %847 = vmatprep.subr.mxu0 0.0
    %848 = vmatpush2.msra.mxu0 0.0
    %849 = vmatprep.subr.mxu0 0.0
    %850 = vmatpush2.msra.mxu0 0.0
    %851 = vmatprep.subr.mxu0 0.0
    %852 = vmatpush2.msra.mxu0 0.0
    %853 = vmatprep.subr.mxu0 0.0
    %854 = vmatpush2.msra.mxu0 0.0
    %855 = vmatprep.subr.mxu0 0.0
    %856 = vmatpush2.msra.mxu0 0.0
    %857 = vmatprep.subr.mxu0 0.0
    %858 = vmatpush2.msra.mxu0 0.0
    %859 = vmatprep.subr.mxu0 0.0
    %860 = vmatpush2.msra.mxu0 0.0
    %861 = vmatprep.subr.mxu0 0.0
    %862 = vmatpush2.msra.mxu0 0.0
    %863 = vmatprep.subr.mxu0 0.0
    %864 = vmatpush2.msra.mxu0 0.0
    %865 = vmatprep.subr.mxu0 0.0
    %866 = vmatpush2.msra.mxu0 0.0
    %867 = vmatprep.subr.mxu0 0.0
    %868 = vmatpush2.msra.mxu0 0.0
    %869 = vmatprep.subr.mxu0 0.0
    %870 = vmatpush2.msra.mxu0 0.0
    %871 = vmatprep.subr.mxu0 0.0
    %872 = vmatpush2.msra.mxu0 0.0
    %873 = vmatprep.subr.mxu0 0.0
    %874 = vmatpush2.msra.mxu0 0.0
    %875 = vmatprep.subr.mxu0 0.0
    %876 = vmatpush2.msra.mxu0 0.0
    %877 = vmatprep.mubr.f32.mxu0 0.0
    %878 = vmatmul.mubr.f32.gmra.mxu0 %v727
    %v879 = vpop.f32.mrf.mxu0
    %v880 = vadd.f32 %v724, %v879
    %v881 = vpop.f32.mrf.mxu0
    %v882 = vadd.f32 %v724, %v881
    %883 = vdwg.mxu0
    %v884 = vmax.f32 %v809, 0.0
    %v885 = vmax.f32 %v811, 0.0
    %v886 = vmax.f32 %v880, 0.0
    %v887 = vmax.f32 %v882, 0.0
    %889 = vset.pattern.permute.xlu0 16
    %890 = vperm.xlu0 %889, %v81
    %v891 = vpop.permute.xlu0 %890
    %vm893 = vcmask 39936
    %v894 = vsel %vm893, %v81, 0
    %vm896 = vcmask 1044480
    %v898 = vsel %vm896, %v884, 0
    %v901 = vsel %vm896, %v885, 0
    %v904 = vsel %vm896, %v886, 0
    %v907 = vsel %vm896, %v887, 0
    %909 = vmatprep.subr.mxu0 0.0
    %910 = vmatpush1.msra.mxu0 0.0
    %911 = vmatprep.subr.mxu0 0.0
    %912 = vmatpush1.msra.mxu0 0.0
    %913 = vmatprep.subr.mxu0 0.0
    %914 = vmatpush1.msra.mxu0 0.0
    %915 = vmatprep.subr.mxu0 0.0
    %916 = vmatpush1.msra.mxu0 0.0
    %917 = vmatprep.subr.mxu0 0.0
    %918 = vmatpush1.msra.mxu0 0.0
    %919 = vmatprep.subr.mxu0 0.0
    %920 = vmatpush1.msra.mxu0 0.0
    %921 = vmatprep.subr.mxu0 0.0
    %922 = vmatpush1.msra.mxu0 0.0
    %923 = vmatprep.subr.mxu0 0.0
    %924 = vmatpush1.msra.mxu0 0.0
    %925 = vmatprep.subr.mxu0 0.0
    %926 = vmatpush1.msra.mxu0 0.0
    %927 = vmatprep.subr.mxu0 0.0
    %928 = vmatpush1.msra.mxu0 0.0
    %929 = vmatprep.subr.mxu0 0.0
    %930 = vmatpush1.msra.mxu0 0.0
    %931 = vmatprep.subr.mxu0 0.0
    %932 = vmatpush1.msra.mxu0 0.0
    %933 = vmatprep.subr.mxu0 0.0
    %934 = vmatpush1.msra.mxu0 0.0
    %935 = vmatprep.subr.mxu0 0.0
    %936 = vmatpush1.msra.mxu0 0.0
    %937 = vmatprep.subr.mxu0 0.0
    %938 = vmatpush1.msra.mxu0 0.0
    %939 = vmatprep.subr.mxu0 %v901
    %940 = vmatpush1.msra.mxu0 %v898
    %941 = vmatprep.subr.mxu0 0.0
    %942 = vmatpush2.msra.mxu0 0.0
    %943 = vmatprep.subr.mxu0 0.0
    %944 = vmatpush2.msra.mxu0 0.0
    %945 = vmatprep.subr.mxu0 0.0
    %946 = vmatpush2.msra.mxu0 0.0
    %947 = vmatprep.subr.mxu0 0.0
    %948 = vmatpush2.msra.mxu0 0.0
    %949 = vmatprep.subr.mxu0 0.0
    %950 = vmatpush2.msra.mxu0 0.0
    %951 = vmatprep.subr.mxu0 0.0
    %952 = vmatpush2.msra.mxu0 0.0
    %953 = vmatprep.subr.mxu0 0.0
    %954 = vmatpush2.msra.mxu0 0.0
    %955 = vmatprep.subr.mxu0 0.0
    %956 = vmatpush2.msra.mxu0 0.0
    %957 = vmatprep.subr.mxu0 0.0
    %958 = vmatpush2.msra.mxu0 0.0
    %959 = vmatprep.subr.mxu0 0.0
    %960 = vmatpush2.msra.mxu0 0.0
    %961 = vmatprep.subr.mxu0 0.0
    %962 = vmatpush2.msra.mxu0 0.0
    %963 = vmatprep.subr.mxu0 0.0
    %964 = vmatpush2.msra.mxu0 0.0
    %965 = vmatprep.subr.mxu0 0.0
    %966 = vmatpush2.msra.mxu0 0.0
    %967 = vmatprep.subr.mxu0 0.0
    %968 = vmatpush2.msra.mxu0 0.0
    %969 = vmatprep.subr.mxu0 0.0
    %970 = vmatpush2.msra.mxu0 0.0
    %971 = vmatprep.subr.mxu0 0.0
    %972 = vmatpush2.msra.mxu0 0.0
    %973 = vmatprep.mubr.f32.mxu0 0.0
    %974 = vmatmul.mubr.f32.gmra.mxu0 %v894
    %v975 = vpop.f32.mrf.mxu0
    %v976 = vadd.f32 %v891, %v975
    %v977 = vpop.f32.mrf.mxu0
    %v978 = vadd.f32 %v891, %v977
    %979 = vdwg.mxu0
    %980 = vmatprep.subr.mxu0 0.0
    %981 = vmatpush1.msra.mxu0 0.0
    %982 = vmatprep.subr.mxu0 0.0
    %983 = vmatpush1.msra.mxu0 0.0
    %984 = vmatprep.subr.mxu0 0.0
    %985 = vmatpush1.msra.mxu0 0.0
    %986 = vmatprep.subr.mxu0 0.0
    %987 = vmatpush1.msra.mxu0 0.0
    %988 = vmatprep.subr.mxu0 0.0
    %989 = vmatpush1.msra.mxu0 0.0
    %990 = vmatprep.subr.mxu0 0.0
    %991 = vmatpush1.msra.mxu0 0.0
    %992 = vmatprep.subr.mxu0 0.0
    %993 = vmatpush1.msra.mxu0 0.0
    %994 = vmatprep.subr.mxu0 0.0
    %995 = vmatpush1.msra.mxu0 0.0
    %996 = vmatprep.subr.mxu0 0.0
    %997 = vmatpush1.msra.mxu0 0.0
    %998 = vmatprep.subr.mxu0 0.0
    %999 = vmatpush1.msra.mxu0 0.0
    %1000 = vmatprep.subr.mxu0 0.0
    %1001 = vmatpush1.msra.mxu0 0.0
    %1002 = vmatprep.subr.mxu0 0.0
    %1003 = vmatpush1.msra.mxu0 0.0
    %1004 = vmatprep.subr.mxu0 0.0
    %1005 = vmatpush1.msra.mxu0 0.0
    %1006 = vmatprep.subr.mxu0 0.0
    %1007 = vmatpush1.msra.mxu0 0.0
    %1008 = vmatprep.subr.mxu0 0.0
    %1009 = vmatpush1.msra.mxu0 0.0
    %1010 = vmatprep.subr.mxu0 %v907
    %1011 = vmatpush1.msra.mxu0 %v904
    %1012 = vmatprep.subr.mxu0 0.0
    %1013 = vmatpush2.msra.mxu0 0.0
    %1014 = vmatprep.subr.mxu0 0.0
    %1015 = vmatpush2.msra.mxu0 0.0
    %1016 = vmatprep.subr.mxu0 0.0
    %1017 = vmatpush2.msra.mxu0 0.0
    %1018 = vmatprep.subr.mxu0 0.0
    %1019 = vmatpush2.msra.mxu0 0.0
    %1020 = vmatprep.subr.mxu0 0.0
    %1021 = vmatpush2.msra.mxu0 0.0
    %1022 = vmatprep.subr.mxu0 0.0
    %1023 = vmatpush2.msra.mxu0 0.0
    %1024 = vmatprep.subr.mxu0 0.0
    %1025 = vmatpush2.msra.mxu0 0.0
    %1026 = vmatprep.subr.mxu0 0.0
    %1027 = vmatpush2.msra.mxu0 0.0
    %1028 = vmatprep.subr.mxu0 0.0
    %1029 = vmatpush2.msra.mxu0 0.0
    %1030 = vmatprep.subr.mxu0 0.0
    %1031 = vmatpush2.msra.mxu0 0.0
    %1032 = vmatprep.subr.mxu0 0.0
    %1033 = vmatpush2.msra.mxu0 0.0
    %1034 = vmatprep.subr.mxu0 0.0
    %1035 = vmatpush2.msra.mxu0 0.0
    %1036 = vmatprep.subr.mxu0 0.0
    %1037 = vmatpush2.msra.mxu0 0.0
    %1038 = vmatprep.subr.mxu0 0.0
    %1039 = vmatpush2.msra.mxu0 0.0
    %1040 = vmatprep.subr.mxu0 0.0
    %1041 = vmatpush2.msra.mxu0 0.0
    %1042 = vmatprep.subr.mxu0 0.0
    %1043 = vmatpush2.msra.mxu0 0.0
    %1044 = vmatprep.mubr.f32.mxu0 0.0
    %1045 = vmatmul.mubr.f32.gmra.mxu0 %v894
    %v1046 = vpop.f32.mrf.mxu0
    %v1047 = vadd.f32 %v891, %v1046
    %v1048 = vpop.f32.mrf.mxu0
    %v1049 = vadd.f32 %v891, %v1048
    %1050 = vdwg.mxu0
    %v1055 = vcombine.low %v976, %v978
    %v1056 = vcombine.low %v1047, %v1049
    %1059 = vst [vmem:[#allocation2] sm:$0x77] %v1055
    %1060 = vst [vmem:[#allocation2 + $0x8] sm:$0x77] %v1056
    // Predicated region
    $region10: #{tpu_custom_call.1} parent=1 // pred_check
      _
    $region11: #{tpu_custom_call.1} parent=1 // pred_check_branch
      %1062 = sbr.rel (0) target = $region13
    $region12: #{tpu_custom_call.1} parent=1 // pred_region
      %s1064 = ssub.s32 256, 256
      %1065 = vsyncadd [#allocation3], %s1064
      %s1067 = sshll.u32 [#allocation2], 4
      %s1068 = int_to_ptr.vmem [resolvable:$true] %s1067
      %1070 = dma.vmem_to_hbm [thread:$0]  %s1068, 256, %s2, [#allocation3]
    $region13: #{tpu_custom_call.1} parent=1 // pred_fallthru
      _
    // Predicated region
    $region14: #{tpu_custom_call.1} parent=1 // pred_check
      _
    $region15: #{tpu_custom_call.1} parent=1 // pred_check_branch
      %1072 = sbr.rel (0) target = $region17
    $region16: #{tpu_custom_call.1} parent=1 // pred_region
      %1073 = dma.done [#allocation3], 256
    $region17: #{tpu_custom_call.1} parent=1 // pred_fallthru
      _
    %1074 = vsyncpa [#allocation3], 1

</llo_original>
